<compile_context>
chip_gen: v6e
topology: v6e:2x2x1
jax: 0.10.0
libtpu: 0.0.40
codegen_flags: <defaults>
</compile_context>

<pallas_src>
import functools

import jax
import jax.numpy as jnp
from jax.experimental import pallas as pl
from jax.experimental.pallas import tpu as pltpu


def _round_up(n, m):
    return ((n + m - 1) // m) * m


def _stacked_embed_kernel(x_ref, w_ref, b_ref, o_ref):
    # One batch tile per grid step:  (TB, F) @ (F, D_pad) + (1, D_pad).
    # Accumulate in f32 on the MXU, add bias once, cast to output dtype.
    acc = jnp.dot(x_ref[...], w_ref[...], preferred_element_type=jnp.float32)
    o_ref[...] = (acc + b_ref[...].astype(jnp.float32)).astype(o_ref.dtype)


@functools.partial(jax.jit, static_argnames=("tb",))
def stacked_linear_embed(x, w_all, b_all, *, tb=512):
    """Fused embedding: (B, F) @ (F, D_pad) + (1, D_pad) -> (B, D_pad).

    x:     (B, F)        input features (shared across all layers)
    w_all: (F, D_pad)    all layer weights concatenated along the output dim,
                         zero-padded so D_pad is a multiple of 128
    b_all: (1, D_pad)    concatenated biases, zero-padded to D_pad
    """
    B, F = x.shape
    Fw, Dp = w_all.shape
    assert F == Fw
    assert b_all.shape == (1, Dp)

    # Batch tile: multiple of 8 sublanes, capped so VMEM stays comfortable
    # (2 buffers * TB * (F + D_pad) * 4B well under the scoped limit, incl. v7x).
    TB = min(tb, _round_up(B, 8))
    Bp = _round_up(B, TB)
    if Bp != B:
        x = jnp.pad(x, ((0, Bp - B), (0, 0)))

    y = pl.pallas_call(
        _stacked_embed_kernel,
        out_shape=jax.ShapeDtypeStruct((Bp, Dp), x.dtype),
        grid=(Bp // TB,),
        in_specs=[
            pl.BlockSpec((TB, F), lambda i: (i, 0)),   # batch tile of x
            pl.BlockSpec((F, Dp), lambda i: (0, 0)),   # fused weights, resident
            pl.BlockSpec((1, Dp), lambda i: (0, 0)),   # fused bias, resident
        ],
        out_specs=pl.BlockSpec((TB, Dp), lambda i: (i, 0)),
        compiler_params=pltpu.CompilerParams(
            dimension_semantics=("parallel",),          # megacore on v7x
        ),
    )(x, w_all, b_all)
    return y[:B]


class StackingEmbeddingLayerPallas:
    """JAX/Pallas equivalent of StackingEmbeddingLayer.

    `params` is a list of (W_k, b_k) pairs, one per backbone embedding layer.
    All layers are fused into a single Pallas call; forward(x) returns a list
    of per-layer outputs, exactly like the PyTorch module.
    """

    def __init__(self, params, *, tb=512):
        self.tb = tb
        self.embed_dims = [w.shape[1] for w, _ in params]
        self.num_features = params[0][0].shape[0]
        d_total = sum(self.embed_dims)
        d_pad = _round_up(max(d_total, 1), 128)  # lane-dense output slab

        w_all = jnp.concatenate([w for w, _ in params], axis=1)
        b_all = jnp.concatenate([b.reshape(1, -1) for _, b in params], axis=1)
        if d_pad != d_total:
            w_all = jnp.pad(w_all, ((0, 0), (0, d_pad - d_total)))
            b_all = jnp.pad(b_all, ((0, 0), (0, d_pad - d_total)))
        self.w_all = w_all
        self.b_all = b_all

        # Per-layer slice offsets into the fused output slab.
        offs = []
        off = 0
        for d in self.embed_dims:
            offs.append((off, d))
            off += d
        self.offsets = offs

    def __call__(self, x):
        y_all = stacked_linear_embed(x, self.w_all, self.b_all, tb=self.tb)
        return [y_all[:, off:off + d] for off, d in self.offsets]


def make_params(key, num_features, embed_dims, dtype=jnp.float32):
    """Deterministic parameter init (synthetic; no checkpoint load)."""
    params = []
    for i, d in enumerate(embed_dims):
        kw, kb = jax.random.split(jax.random.fold_in(key, i))
        scale = 1.0 / jnp.sqrt(jnp.float32(num_features))
        w = (jax.random.normal(kw, (num_features, d), dtype=jnp.float32) * scale).astype(dtype)
        b = (jax.random.normal(kb, (d,), dtype=jnp.float32) * 0.01).astype(dtype)
        params.append((w, b))
    return params


if __name__ == "__main__":
    key = jax.random.PRNGKey(0)
    k_x, k_p = jax.random.split(key)

    batch = 20                 # deliberately not a multiple of the tile
    num_features = 32
    embed_dims = [16, 32, 24]  # three stacked backbone embedding layers

    x = jax.random.normal(k_x, (batch, num_features), dtype=jnp.float32)
    params = make_params(k_p, num_features, embed_dims)

    # Small tb so the example also exercises a multi-step (pipelined) grid.
    layer = StackingEmbeddingLayerPallas(params, tb=8)
    outputs = layer(x)
    outputs = [jax.block_until_ready(o) for o in outputs]

    # Reference check against plain JAX (same semantics as the PyTorch loop).
    for (w, b), o in zip(params, outputs):
        ref = x @ w + b
        assert o.shape == ref.shape, (o.shape, ref.shape)
        assert jnp.max(jnp.abs(o - ref)) < 1e-4

    print("KERNEL_OK")
</pallas_src>

<mosaic_0001>
module attributes {stable_mosaic.version = 11 : i64} {
  func.func @_stacked_embed_kernel(%arg0: i32, %arg1: memref<8x32xf32, #tpu.memory_space<vmem>>, %arg2: memref<32x128xf32, #tpu.memory_space<vmem>>, %arg3: memref<1x128xf32, #tpu.memory_space<vmem>>, %arg4: memref<8x128xf32, #tpu.memory_space<vmem>>) attributes {dimension_semantics = [#tpu.dimension_semantics<parallel>], iteration_bounds = array<i64: 3>, scalar_prefetch = 0 : i64, scratch_operands = 0 : i64, tpu.core_type = #tpu.core_type<tc>, window_params = [{transform_indices = @transform_0, window_bounds = array<i64: 8, 32>}, {pipeline_mode = #tpu.pipeline_mode<synchronous>, transform_indices = @transform_1, window_bounds = array<i64: 32, 128>}, {pipeline_mode = #tpu.pipeline_mode<synchronous>, transform_indices = @transform_2, window_bounds = array<i64: 1, 128>}, {transform_indices = @transform_3, window_bounds = array<i64: 8, 128>}]} {
    %c0 = arith.constant 0 : index
    %c0_0 = arith.constant 0 : index
    %0 = vector.load %arg1[%c0, %c0_0] : memref<8x32xf32, #tpu.memory_space<vmem>>, vector<8x32xf32>
    %c0_1 = arith.constant 0 : index
    %c0_2 = arith.constant 0 : index
    %1 = vector.load %arg2[%c0_1, %c0_2] : memref<32x128xf32, #tpu.memory_space<vmem>>, vector<32x128xf32>
    %cst = arith.constant dense<0.000000e+00> : vector<8x128xf32>
    %2 = tpu.matmul %0, %1, %cst {dimension_numbers = #tpu.dot_dimension_numbers<[1], [0], [0], [1], [0, 0, 1, 1], [], []>} : vector<8x32xf32>, vector<32x128xf32>, vector<8x128xf32> -> vector<8x128xf32>
    %c0_3 = arith.constant 0 : index
    %c0_4 = arith.constant 0 : index
    %3 = vector.load %arg3[%c0_3, %c0_4] : memref<1x128xf32, #tpu.memory_space<vmem>>, vector<1x128xf32>
    %4 = vector.broadcast %3 : vector<1x128xf32> to vector<8x128xf32>
    %5 = arith.addf %2, %4 : vector<8x128xf32>
    %c0_5 = arith.constant 0 : index
    %c0_6 = arith.constant 0 : index
    %6 = vector.load %arg4[%c0_5, %c0_6] : memref<8x128xf32, #tpu.memory_space<vmem>>, vector<8x128xf32>
    tpu.vector_store %arg4[%c0_5, %c0_6], %5 {strides = array<i32>} : memref<8x128xf32, #tpu.memory_space<vmem>>, vector<8x128xf32>,
    return
  }
  func.func @transform_0(%arg0: i32) -> (i32, i32) {
    %c0_i32 = arith.constant 0 : i32
    %c0_i32_0 = arith.constant 0 : i32
    return %arg0, %c0_i32 : i32, i32
  }
  func.func @transform_1(%arg0: i32) -> (i32, i32) {
    %c0_i32 = arith.constant 0 : i32
    %c0_i32_0 = arith.constant 0 : i32
    %c0_i32_1 = arith.constant 0 : i32
    return %c0_i32, %c0_i32_0 : i32, i32
  }
  func.func @transform_2(%arg0: i32) -> (i32, i32) {
    %c0_i32 = arith.constant 0 : i32
    %c0_i32_0 = arith.constant 0 : i32
    %c0_i32_1 = arith.constant 0 : i32
    return %c0_i32, %c0_i32_0 : i32, i32
  }
  func.func @transform_3(%arg0: i32) -> (i32, i32) {
    %c0_i32 = arith.constant 0 : i32
    %c0_i32_0 = arith.constant 0 : i32
    return %arg0, %c0_i32 : i32, i32
  }
}

</mosaic_0001>

<llo_original>
// kernel: stacked_linear_embed.1
$region0: #{stacked_linear_embed.1}
  #allocation0 [shape = 'u32[]', space=smem, size = 0x4, offset = 0x4, fixed_abs, tag = 'smem constant byte address 0x4 - core index']
  #allocation1 [shape = 'u32[144,128]{1,0:T(1,128)}', space=vmem, size = 0x12000, scoped, tag = 'internal scratch']
  %s0 = inlined_call_operand.vmem [shape: f32[24,32], index: 0, kind: input, shape index: {}]
  %s1 = inlined_call_operand.vmem [shape: f32[32,128], index: 1, kind: input, shape index: {}]
  %s2 = inlined_call_operand.vmem [shape: f32[1,128], index: 2, kind: input, shape index: {}]
  %s3 = inlined_call_operand.hbm [shape: f32[24,128], index: 3, kind: output, shape index: {}]
  %s4 = sld [smem:[#allocation0]]
  $region45: #{stacked_linear_embed.1} parent=0
    _
  %s6 = ssub.s32 1, %s4
  %s7 = scalar_select 0, %s6, %s4
  $region1: #{stacked_linear_embed.1} parent=0
    #allocation2 [shape = 'u8[8192]{0}', space=vmem, size = 0x2000, scoped, tag = 'output window, operand 0']
    #allocation3 [shape = 's32[2]{0}', space=sflag, size = 0x8, scoped, tag = 'scoped memory for stacked_linear_embed.1']
    %8 = vsyncpa [#allocation3], 0
    %s9 = scalar_lea.sflag [#allocation3], 1
    %10 = vsyncpa %s9, 0
    loop: start=0, step=1, limit=5
    $region2: #{stacked_linear_embed.1} parent=1 // loop_pre_header
      _
    $region3: #{stacked_linear_embed.1} parent=1 // loop_header
      %s12 = sphi 0, %s16
      %p13 = scmp.ge.s32.totalorder %s12, 5
      %s22 = sphi 0, %s24
      %s25 = sphi 0, %s22
      %s26 = sphi 0, %s25
      %s42 = sphi 0, %s26
      %s46 = sphi 0, %s46
      %s48 = sphi 0, %s46
      %s49 = sphi 0, %s48
      %s63 = sphi 0, %s49
      %s67 = sphi 0, %s67
      %s69 = sphi 0, %s67
      %s70 = sphi 0, %s69
      %s84 = sphi 0, %s70
      %s90 = sphi 0, %s92
      %s93 = sphi 0, %s90
      %s94 = sphi 0, %s93
      %s110 = sphi 0, %s94
    $region4: #{stacked_linear_embed.1} parent=1 // loop_header_branch
      %15 = sbr.rel (%p13) target = $region8
    $region5: #{stacked_linear_embed.1} parent=1 // loop_body
      %s17 = ssub.s32 %s12, 1
      %s18 = ssub.s32 %s12, 2
      %s19 = sadd.s32 %s12, 1
      %s20 = ssub.s32 %s12, %s19
      %p21 = scmp.eq.s32.totalorder %s20, 0
      %s23 = sadd.s32 %s22, 1
      %s24 = scalar_select %p21, %s22, %s23
      %p27 = pneg %p21
      %p28 = scmp.eq.s32.totalorder %s12, 2
      %p29 = por %p27, %p28
      %p30 = scmp.ne.s32.totalorder %s22, %s25
      %p31 = scmp.eq.s32.totalorder %s12, 0
      %p32 = por %p30, %p31
      %p33 = scmp.ne.s32.totalorder %s22, %s25
      %p34 = scmp.eq.s32.totalorder %s17, 2
      %p35 = por %p33, %p34
      %p36 = scmp.ne.s32.totalorder %s25, %s26
      %p37 = scmp.eq.s32.totalorder %s17, 0
      %p38 = por %p36, %p37
      %p39 = scmp.ne.s32.totalorder %s25, %s26
      %p40 = scmp.eq.s32.totalorder %s18, 2
      %p41 = por %p39, %p40
      %p43 = scmp.ne.s32.totalorder %s26, %s42
      %p44 = scmp.eq.s32.totalorder %s18, 0
      %p45 = por %p43, %p44
      %s47 = sadd.s32 %s46, 1
      %p50 = scmp.eq.s32.totalorder %s12, 2
      %p51 = scmp.ne.s32.totalorder %s46, %s48
      %p52 = scmp.eq.s32.totalorder %s12, 0
      %p53 = por %p51, %p52
      %p54 = scmp.ne.s32.totalorder %s46, %s48
      %p55 = scmp.eq.s32.totalorder %s17, 2
      %p56 = por %p54, %p55
      %p57 = scmp.ne.s32.totalorder %s48, %s49
      %p58 = scmp.eq.s32.totalorder %s17, 0
      %p59 = por %p57, %p58
      %p60 = scmp.ne.s32.totalorder %s48, %s49
      %p61 = scmp.eq.s32.totalorder %s18, 2
      %p62 = por %p60, %p61
      %p64 = scmp.ne.s32.totalorder %s49, %s63
      %p65 = scmp.eq.s32.totalorder %s18, 0
      %p66 = por %p64, %p65
      %s68 = sadd.s32 %s67, 1
      %p71 = scmp.eq.s32.totalorder %s12, 2
      %p72 = scmp.ne.s32.totalorder %s67, %s69
      %p73 = scmp.eq.s32.totalorder %s12, 0
      %p74 = por %p72, %p73
      %p75 = scmp.ne.s32.totalorder %s67, %s69
      %p76 = scmp.eq.s32.totalorder %s17, 2
      %p77 = por %p75, %p76
      %p78 = scmp.ne.s32.totalorder %s69, %s70
      %p79 = scmp.eq.s32.totalorder %s17, 0
      %p80 = por %p78, %p79
      %p81 = scmp.ne.s32.totalorder %s69, %s70
      %p82 = scmp.eq.s32.totalorder %s18, 2
      %p83 = por %p81, %p82
      %p85 = scmp.ne.s32.totalorder %s70, %s84
      %p86 = scmp.eq.s32.totalorder %s18, 0
      %p87 = por %p85, %p86
      %s88 = ssub.s32 %s12, %s19
      %p89 = scmp.eq.s32.totalorder %s88, 0
      %s91 = sadd.s32 %s90, 1
      %s92 = scalar_select %p89, %s90, %s91
      %p95 = pneg %p89
      %p96 = scmp.eq.s32.totalorder %s12, 2
      %p97 = por %p95, %p96
      %p98 = scmp.ne.s32.totalorder %s90, %s93
      %p99 = scmp.eq.s32.totalorder %s12, 0
      %p100 = por %p98, %p99
      %p101 = scmp.ne.s32.totalorder %s90, %s93
      %p102 = scmp.eq.s32.totalorder %s17, 2
      %p103 = por %p101, %p102
      %p104 = scmp.ne.s32.totalorder %s93, %s94
      %p105 = scmp.eq.s32.totalorder %s17, 0
      %p106 = por %p104, %p105
      %p107 = scmp.ne.s32.totalorder %s93, %s94
      %p108 = scmp.eq.s32.totalorder %s18, 2
      %p109 = por %p107, %p108
      %p111 = scmp.ne.s32.totalorder %s94, %s110
      %p112 = scmp.eq.s32.totalorder %s18, 0
      %p113 = por %p111, %p112
      %p114 = scmp.le.s32.totalorder 1, %s12
      %p115 = scmp.lt.s32.totalorder %s12, 4
      %p116 = pnand %p114, %p115
      %p117 = pneg %p116
      // Predicated region
      $region9: #{stacked_linear_embed.1} parent=5 // pred_check
        _
      $region10: #{stacked_linear_embed.1} parent=5 // pred_check_branch
        %119 = sbr.rel (%p116) target = $region12
      $region11: #{stacked_linear_embed.1} parent=5 // pred_region
        %s120 = ssub.s32 %s12, 1
        // Predicated region
        $region13: #{stacked_linear_embed.1} parent=11 // pred_check
          %p121 = pneg %p59
        $region14: #{stacked_linear_embed.1} parent=11 // pred_check_branch
          %123 = sbr.rel (%p121) target = $region16
        $region15: #{stacked_linear_embed.1} parent=11 // pred_region
          _
        $region16: #{stacked_linear_embed.1} parent=11 // pred_fallthru
          _
        // Predicated region
        $region17: #{stacked_linear_embed.1} parent=11 // pred_check
          %p124 = pneg %p80
        $region18: #{stacked_linear_embed.1} parent=11 // pred_check_branch
          %126 = sbr.rel (%p124) target = $region20
        $region19: #{stacked_linear_embed.1} parent=11 // pred_region
          _
        $region20: #{stacked_linear_embed.1} parent=11 // pred_fallthru
          _
      $region12: #{stacked_linear_embed.1} parent=5 // pred_fallthru
        _
      %p127 = scmp.lt.s32.totalorder %s12, 3
      // Predicated region
      $region21: #{stacked_linear_embed.1} parent=5 // pred_check
        %p128 = pneg %p127
      $region22: #{stacked_linear_embed.1} parent=5 // pred_check_branch
        %130 = sbr.rel (%p128) target = $region24
      $region23: #{stacked_linear_embed.1} parent=5 // pred_region
        // Predicated region
        $region25: #{stacked_linear_embed.1} parent=23 // pred_check
          %p131 = pneg %p32
        $region26: #{stacked_linear_embed.1} parent=23 // pred_check_branch
          %133 = sbr.rel (%p131) target = $region28
        $region27: #{stacked_linear_embed.1} parent=23 // pred_region
          %p134 = scmp.lt.s32.totalorder %s12, 2
          %s135 = scalar_select %p134, %s12, 2
          %s136 = smul.addr %s135, 8
          %s137 = scalar_lea.vmem %s0, %s136
        $region28: #{stacked_linear_embed.1} parent=23 // pred_fallthru
          _
      $region24: #{stacked_linear_embed.1} parent=5 // pred_fallthru
        _
      %p138 = scmp.le.s32.totalorder 1, %s12
      %p139 = scmp.lt.s32.totalorder %s12, 4
      %p140 = pnand %p138, %p139
      %p141 = pneg %p140
      // Predicated region
      $region29: #{stacked_linear_embed.1} parent=5 // pred_check
        _
      $region30: #{stacked_linear_embed.1} parent=5 // pred_check_branch
        %143 = sbr.rel (%p140) target = $region32
      $region31: #{stacked_linear_embed.1} parent=5 // pred_region
        %s144 = ssub.s32 %s12, 1
        %p145 = scmp.lt.s32.totalorder %s17, 2
        %s146 = scalar_select %p145, %s17, 2
        %s147 = smul.addr %s146, 8
        %s148 = scalar_lea.vmem %s0, %s147
        %p149 = pneg %p38
        %p150 = pneg %p35
        %p151 = pneg %p59
        %p152 = pneg %p56
        %p153 = pneg %p80
        %p154 = pneg %p77
        %p155 = pneg %p106
        %p156 = pneg %p103
        %s157 = sand.u32 %s93, 1
        %s158 = scalar_lea.sflag [#allocation3], %s157
        %s159 = sand.u32 %s93, 1
        %s160 = smul.addr %s159, 8
        %s161 = scalar_lea.vmem [#allocation2], %s160
        %p162 = scmp.lt.s32.totalorder %s17, 2
        %s163 = scalar_select %p162, %s17, 2
        %s164 = smul.addr %s163, 8
        %s165 = scalar_lea.vmem %s0, %s164
        %v166 = vld [vmem:[%s165] sm:$0xff]
        %v167 = vld [vmem:[%s1] sm:$0xff]
        %v168 = vld [vmem:[%s1 + $0x8] sm:$0xff]
        %v169 = vld [vmem:[%s1 + $0x10] sm:$0xff]
        %v170 = vld [vmem:[%s1 + $0x18] sm:$0xff]
        %v171 = vld [vmem:[%s2] sm:$0x1]
        %v173 = vlaneseq
        %v174 = vshrl.u32 %v173, 7
        %v175 = vsub.s32 0, %v174
        %v176 = vrot.slane %v171, %v175
        %vm178 = vcmask 261120
        %v180 = vsel %vm178, %v166, 0
        %182 = vmatprep.subr.mxu0 0.0
        %183 = vmatpush1.msra.mxu0 0.0
        %184 = vmatprep.subr.mxu0 0.0
        %185 = vmatpush1.msra.mxu0 0.0
        %186 = vmatprep.subr.mxu0 0.0
        %187 = vmatpush1.msra.mxu0 0.0
        %188 = vmatprep.subr.mxu0 0.0
        %189 = vmatpush1.msra.mxu0 0.0
        %190 = vmatprep.subr.mxu0 0.0
        %191 = vmatpush1.msra.mxu0 0.0
        %192 = vmatprep.subr.mxu0 0.0
        %193 = vmatpush1.msra.mxu0 0.0
        %194 = vmatprep.subr.mxu0 0.0
        %195 = vmatpush1.msra.mxu0 0.0
        %196 = vmatprep.subr.mxu0 0.0
        %197 = vmatpush1.msra.mxu0 0.0
        %198 = vmatprep.subr.mxu0 0.0
        %199 = vmatpush1.msra.mxu0 0.0
        %200 = vmatprep.subr.mxu0 0.0
        %201 = vmatpush1.msra.mxu0 0.0
        %202 = vmatprep.subr.mxu0 0.0
        %203 = vmatpush1.msra.mxu0 0.0
        %204 = vmatprep.subr.mxu0 0.0
        %205 = vmatpush1.msra.mxu0 0.0
        %206 = vmatprep.subr.mxu0 0.0
        %207 = vmatpush1.msra.mxu0 %v170
        %208 = vmatprep.subr.mxu0 0.0
        %209 = vmatpush1.msra.mxu0 %v169
        %210 = vmatprep.subr.mxu0 0.0
        %211 = vmatpush1.msra.mxu0 %v168
        %212 = vmatprep.subr.mxu0 0.0
        %213 = vmatpush1.msra.mxu0 %v167
        %214 = vmatprep.subr.mxu0 0.0
        %215 = vmatpush2.msra.mxu0 0.0
        %216 = vmatprep.subr.mxu0 0.0
        %217 = vmatpush2.msra.mxu0 0.0
        %218 = vmatprep.subr.mxu0 0.0
        %219 = vmatpush2.msra.mxu0 0.0
        %220 = vmatprep.subr.mxu0 0.0
        %221 = vmatpush2.msra.mxu0 0.0
        %222 = vmatprep.subr.mxu0 0.0
        %223 = vmatpush2.msra.mxu0 0.0
        %224 = vmatprep.subr.mxu0 0.0
        %225 = vmatpush2.msra.mxu0 0.0
        %226 = vmatprep.subr.mxu0 0.0
        %227 = vmatpush2.msra.mxu0 0.0
        %228 = vmatprep.subr.mxu0 0.0
        %229 = vmatpush2.msra.mxu0 0.0
        %230 = vmatprep.subr.mxu0 0.0
        %231 = vmatpush2.msra.mxu0 0.0
        %232 = vmatprep.subr.mxu0 0.0
        %233 = vmatpush2.msra.mxu0 0.0
        %234 = vmatprep.subr.mxu0 0.0
        %235 = vmatpush2.msra.mxu0 0.0
        %236 = vmatprep.subr.mxu0 0.0
        %237 = vmatpush2.msra.mxu0 0.0
        %238 = vmatprep.subr.mxu0 0.0
        %239 = vmatpush2.msra.mxu0 0.0
        %240 = vmatprep.subr.mxu0 0.0
        %241 = vmatpush2.msra.mxu0 0.0
        %242 = vmatprep.subr.mxu0 0.0
        %243 = vmatpush2.msra.mxu0 0.0
        %244 = vmatprep.subr.mxu0 0.0
        %245 = vmatpush2.msra.mxu0 0.0
        %246 = vmatprep.mubr.f32.mxu0 0.0
        %247 = vmatmul.mubr.f32.gmra.mxu0 %v180
        %v248 = vpop.f32.mrf.mxu0
        %v249 = vadd.f32 %v176, %v248
        %v250 = vpop.f32.mrf.mxu0
        %251 = vdwg.mxu0
        %252 = vst [vmem:[%s161] sm:$0xff] %v249
        %s253 = sand.u32 %s93, 1
        %s254 = scalar_lea.sflag [#allocation3], %s253
        %s255 = sand.u32 %s93, 1
        %s256 = smul.addr %s255, 8
        %s257 = scalar_lea.vmem [#allocation2], %s256
        // Predicated region
        $region33: #{stacked_linear_embed.1} parent=31 // pred_check
          %p258 = pneg %p103
        $region34: #{stacked_linear_embed.1} parent=31 // pred_check_branch
          %260 = sbr.rel (%p258) target = $region36
        $region35: #{stacked_linear_embed.1} parent=31 // pred_region
          %s262 = ssub.s32 128, 128
          %263 = vsyncadd %s254, %s262
          %s264 = smul.addr %s17, 128
          %s265 = scalar_lea.hbm %s3, %s264
          %s267 = sshll.u32 %s257, 4
          %s268 = int_to_ptr.vmem [resolvable:$true] %s267
          %270 = dma.vmem_to_hbm [thread:$0]  %s268, 128, %s265, %s254
        $region36: #{stacked_linear_embed.1} parent=31 // pred_fallthru
          _
      $region32: #{stacked_linear_embed.1} parent=5 // pred_fallthru
        _
      %p271 = scmp.le.s32.totalorder 2, %s12
      // Predicated region
      $region37: #{stacked_linear_embed.1} parent=5 // pred_check
        %p272 = pneg %p271
      $region38: #{stacked_linear_embed.1} parent=5 // pred_check_branch
        %274 = sbr.rel (%p272) target = $region40
      $region39: #{stacked_linear_embed.1} parent=5 // pred_region
        %s275 = ssub.s32 %s12, 2
        // Predicated region
        $region41: #{stacked_linear_embed.1} parent=39 // pred_check
          %p276 = pneg %p109
        $region42: #{stacked_linear_embed.1} parent=39 // pred_check_branch
          %278 = sbr.rel (%p276) target = $region44
        $region43: #{stacked_linear_embed.1} parent=39 // pred_region
          %s279 = sand.u32 %s94, 1
          %s280 = scalar_lea.sflag [#allocation3], %s279
          %s281 = sand.u32 %s94, 1
          %s282 = smul.addr %s281, 8
          %s283 = scalar_lea.vmem [#allocation2], %s282
          %284 = dma.done %s280, 128
        $region44: #{stacked_linear_embed.1} parent=39 // pred_fallthru
          _
      $region40: #{stacked_linear_embed.1} parent=5 // pred_fallthru
        _
    $region6: #{stacked_linear_embed.1} parent=1 // loop_footer
      %s16 = sadd.s32 1, %s12
    $region7: #{stacked_linear_embed.1} parent=1 // loop_footer_branch
      %11 = sbr.rel target = $region3
    $region8: #{stacked_linear_embed.1} parent=1 // loop_exit
      _
    %285 = vsyncpa [#allocation3], 1
    %s286 = scalar_lea.sflag [#allocation3], 1
    %287 = vsyncpa %s286, 1

</llo_original>
